<compile_context>
chip_gen: v7x
topology: tpu7x:2x2x1
jax: 0.10.0
libtpu: 0.0.40
codegen_flags: <defaults>
</compile_context>

<pallas_src>
import math

import numpy as np
import jax
import jax.numpy as jnp
from jax.experimental import pallas as pl
from jax.experimental.pallas import tpu as pltpu


def _round_up(x: int, m: int) -> int:
    return ((x + m - 1) // m) * m


def _layer_features(in_features: int, num_layers: int, out_features: int):
    """Same layer-width interpolation as the PyTorch module."""
    step = (out_features - in_features) / num_layers
    feats = [math.ceil(in_features + idx * step) for idx in range(num_layers + 1)]
    feats[0] = in_features
    feats[-1] = out_features
    return feats


def make_encoder_params(in_features, num_layers, out_features, seed=0):
    """nn.Linear-style uniform init, on host (numpy) -> zero XLA dispatches."""
    feats = _layer_features(in_features, num_layers, out_features)
    rng = np.random.default_rng(seed)
    params = []
    for l in range(num_layers):
        fan_in, fan_out = feats[l], feats[l + 1]
        bound = 1.0 / math.sqrt(fan_in)
        # Stored pre-transposed: (in_features, out_features).
        w = rng.uniform(-bound, bound, size=(fan_in, fan_out)).astype(np.float32)
        b = rng.uniform(-bound, bound, size=(fan_out,)).astype(np.float32)
        params.append((w, b))
    return params, feats


def pack_params(params, feats):
    """Zero-pad each layer to its own lane-aligned width (multiple of 128).

    Zero padding is semantics-preserving: zero weight rows/cols + zero bias
    keep padded lanes at 0 through ReLU.  Packing happens once, on the host.
    """
    pfeats = [_round_up(f, 128) for f in feats]
    packed = []
    for l, (w, b) in enumerate(params):
        kpad, npad = pfeats[l], pfeats[l + 1]
        wp = np.zeros((kpad, npad), np.float32)
        wp[: w.shape[0], : w.shape[1]] = w
        bp = np.zeros((1, npad), np.float32)
        bp[0, : b.shape[0]] = b
        packed.extend((wp, bp))
    return packed, pfeats


def _make_kernel(num_layers):
    def kernel(*refs):
        # refs = (x, w0, b0, ..., w_{L-1}, b_{L-1}, out); all weights resident.
        x_ref = refs[0]
        o_ref = refs[1 + 2 * num_layers]
        act = x_ref[...]  # bf16 (tm, F0_pad)
        for l in range(num_layers):
            w_ref = refs[1 + 2 * l]
            b_ref = refs[2 + 2 * l]
            # MXU matmul in bf16 with f32 accumulation; bias + ReLU in f32 (VPU).
            acc = jnp.dot(act, w_ref[...], preferred_element_type=jnp.float32)
            acc = jnp.maximum(acc + b_ref[...], 0.0)
            if l == num_layers - 1:
                # Final layer: write directly from the f32 accumulator.
                o_ref[...] = acc.astype(o_ref.dtype)
            else:
                act = acc.astype(jnp.bfloat16)  # bf16 activation carry
    return kernel


def build_encoder_forward(feats, out_features, *, block_m=512):
    num_layers = len(feats) - 1
    pfeats = [_round_up(f, 128) for f in feats]
    f0p, fop = pfeats[0], pfeats[-1]

    try:
        vmem_cap = pltpu.get_tpu_info().vmem_capacity_bytes
    except Exception:
        vmem_cap = 64 * 1024 * 1024  # conservative (v7x per-TC)

    kernel = _make_kernel(num_layers)

    def forward(x, *wb):
        B, in_features = x.shape

        # Batch tile: multiple of 8 (sublane).  block_m=512 amortizes per-step
        # overhead and fills the 256-row MXUs of v6e/v7x; for large B this
        # still leaves Bp//tm >= 2 so both v7x TensorCores get work.
        tm = min(block_m, _round_up(B, 8))
        Bp = _round_up(B, tm)
        grid = (Bp // tm,)

        # Pad input to (Bp, f0p) in bf16 (halves x DMA bytes).
        x_pad = (
            jnp.zeros((Bp, f0p), jnp.bfloat16)
            .at[:B, :in_features]
            .set(x.astype(jnp.bfloat16))
        )

        ins = [x_pad]
        in_specs = [pl.BlockSpec((tm, f0p), lambda i: (i, 0))]
        weight_bytes = 0
        for l in range(num_layers):
            kpad, npad = pfeats[l], pfeats[l + 1]
            ins.append(wb[2 * l].astype(jnp.bfloat16))  # bf16 weights on MXU
            ins.append(wb[2 * l + 1])                   # f32 bias
            # Constant index_map => fetched from HBM once, then VMEM-resident
            # for all batch blocks.
            in_specs.append(pl.BlockSpec((kpad, npad), lambda i: (0, 0)))
            in_specs.append(pl.BlockSpec((1, npad), lambda i: (0, 0)))
            weight_bytes += kpad * npad * 2 + npad * 4

        # TODO(synk): if num_layers * F^2 * 2B outgrows the per-core VMEM budget
        # (notably v7x's 64 MiB per TC), fall back to streamed weights with K/N
        # tiling; not needed at these sizes.
        need = (
            2 * tm * f0p * 2          # double-buffered bf16 x tiles
            + 2 * weight_bytes        # resident weights/biases (+ headroom)
            + 2 * tm * fop * 4        # double-buffered f32 output tiles
            + tm * max(pfeats) * 4    # in-kernel activation live range
        )
        vmem_limit = int(min(0.8 * vmem_cap, max(2 * need, 32 * 1024 * 1024)))

        out_pad = pl.pallas_call(
            kernel,
            out_shape=jax.ShapeDtypeStruct((Bp, fop), jnp.float32),
            grid=grid,
            in_specs=in_specs,
            out_specs=pl.BlockSpec((tm, fop), lambda i: (i, 0)),
            compiler_params=pltpu.CompilerParams(
                dimension_semantics=("parallel",),
                vmem_limit_bytes=vmem_limit,
            ),
        )(*ins)

        return out_pad[:B, :out_features]

    return jax.jit(forward)


def encoder_reference(x, params):
    """Host-side f32 reference (matches the PyTorch module's math)."""
    out = np.asarray(x, dtype=np.float32)
    for w, b in params:
        out = np.maximum(out @ w + b[None, :], 0.0)
    return out


if __name__ == "__main__":
    in_features, num_layers, out_features = 16, 3, 32
    batch = 8

    # Parameters built & packed once on the host (no per-layer XLA dispatch).
    params, feats = make_encoder_params(in_features, num_layers, out_features, seed=0)
    packed, _ = pack_params(params, feats)
    forward = build_encoder_forward(feats, out_features)

    # Deterministic input.
    key = jax.random.PRNGKey(0)
    x = jax.random.normal(key, (batch, in_features), jnp.float32)

    out = forward(x, *packed)
    out = jax.block_until_ready(out)
    out_np = np.asarray(out)

    ref = encoder_reference(np.asarray(x), params)

    assert out_np.shape == (batch, out_features), out_np.shape
    max_err = float(np.max(np.abs(out_np - ref)))
    assert np.allclose(out_np, ref, atol=5e-2, rtol=5e-2), max_err

    print("KERNEL_OK")
</pallas_src>

<mosaic_0001>
module attributes {stable_mosaic.version = 11 : i64} {
  func.func @kernel(%arg0: i32, %arg1: memref<8x128xbf16, #tpu.memory_space<vmem>>, %arg2: memref<128x128xbf16, #tpu.memory_space<vmem>>, %arg3: memref<1x128xf32, #tpu.memory_space<vmem>>, %arg4: memref<128x128xbf16, #tpu.memory_space<vmem>>, %arg5: memref<1x128xf32, #tpu.memory_space<vmem>>, %arg6: memref<128x128xbf16, #tpu.memory_space<vmem>>, %arg7: memref<1x128xf32, #tpu.memory_space<vmem>>, %arg8: memref<8x128xf32, #tpu.memory_space<vmem>>) attributes {dimension_semantics = [#tpu.dimension_semantics<parallel>], iteration_bounds = array<i64: 1>, scalar_prefetch = 0 : i64, scratch_operands = 0 : i64, tpu.core_type = #tpu.core_type<tc>, window_params = [{transform_indices = @transform_0, window_bounds = array<i64: 8, 128>}, {pipeline_mode = #tpu.pipeline_mode<synchronous>, transform_indices = @transform_1, window_bounds = array<i64: 128, 128>}, {pipeline_mode = #tpu.pipeline_mode<synchronous>, transform_indices = @transform_2, window_bounds = array<i64: 1, 128>}, {pipeline_mode = #tpu.pipeline_mode<synchronous>, transform_indices = @transform_3, window_bounds = array<i64: 128, 128>}, {pipeline_mode = #tpu.pipeline_mode<synchronous>, transform_indices = @transform_4, window_bounds = array<i64: 1, 128>}, {pipeline_mode = #tpu.pipeline_mode<synchronous>, transform_indices = @transform_5, window_bounds = array<i64: 128, 128>}, {pipeline_mode = #tpu.pipeline_mode<synchronous>, transform_indices = @transform_6, window_bounds = array<i64: 1, 128>}, {transform_indices = @transform_7, window_bounds = array<i64: 8, 128>}]} {
    %c0 = arith.constant 0 : index
    %c0_0 = arith.constant 0 : index
    %0 = vector.load %arg1[%c0, %c0_0] : memref<8x128xbf16, #tpu.memory_space<vmem>>, vector<8x128xbf16>
    %c0_1 = arith.constant 0 : index
    %c0_2 = arith.constant 0 : index
    %1 = vector.load %arg2[%c0_1, %c0_2] : memref<128x128xbf16, #tpu.memory_space<vmem>>, vector<128x128xbf16>
    %cst = arith.constant dense<0.000000e+00> : vector<8x128xf32>
    %2 = tpu.matmul %0, %1, %cst {dimension_numbers = #tpu.dot_dimension_numbers<[1], [0], [0], [1], [0, 0, 1, 1], [], []>} : vector<8x128xbf16>, vector<128x128xbf16>, vector<8x128xf32> -> vector<8x128xf32>
    %c0_3 = arith.constant 0 : index
    %c0_4 = arith.constant 0 : index
    %3 = vector.load %arg3[%c0_3, %c0_4] : memref<1x128xf32, #tpu.memory_space<vmem>>, vector<1x128xf32>
    %4 = vector.broadcast %3 : vector<1x128xf32> to vector<8x128xf32>
    %5 = arith.addf %2, %4 : vector<8x128xf32>
    %cst_5 = arith.constant 0.000000e+00 : f32
    %6 = vector.broadcast %cst_5 : f32 to vector<8x128xf32>
    %7 = arith.maximumf %5, %6 : vector<8x128xf32>
    %8 = arith.truncf %7 : vector<8x128xf32> to vector<8x128xbf16>
    %c0_6 = arith.constant 0 : index
    %c0_7 = arith.constant 0 : index
    %9 = vector.load %arg4[%c0_6, %c0_7] : memref<128x128xbf16, #tpu.memory_space<vmem>>, vector<128x128xbf16>
    %cst_8 = arith.constant dense<0.000000e+00> : vector<8x128xf32>
    %10 = tpu.matmul %8, %9, %cst_8 {dimension_numbers = #tpu.dot_dimension_numbers<[1], [0], [0], [1], [0, 0, 1, 1], [], []>} : vector<8x128xbf16>, vector<128x128xbf16>, vector<8x128xf32> -> vector<8x128xf32>
    %c0_9 = arith.constant 0 : index
    %c0_10 = arith.constant 0 : index
    %11 = vector.load %arg5[%c0_9, %c0_10] : memref<1x128xf32, #tpu.memory_space<vmem>>, vector<1x128xf32>
    %12 = vector.broadcast %11 : vector<1x128xf32> to vector<8x128xf32>
    %13 = arith.addf %10, %12 : vector<8x128xf32>
    %cst_11 = arith.constant 0.000000e+00 : f32
    %14 = vector.broadcast %cst_11 : f32 to vector<8x128xf32>
    %15 = arith.maximumf %13, %14 : vector<8x128xf32>
    %16 = arith.truncf %15 : vector<8x128xf32> to vector<8x128xbf16>
    %c0_12 = arith.constant 0 : index
    %c0_13 = arith.constant 0 : index
    %17 = vector.load %arg6[%c0_12, %c0_13] : memref<128x128xbf16, #tpu.memory_space<vmem>>, vector<128x128xbf16>
    %cst_14 = arith.constant dense<0.000000e+00> : vector<8x128xf32>
    %18 = tpu.matmul %16, %17, %cst_14 {dimension_numbers = #tpu.dot_dimension_numbers<[1], [0], [0], [1], [0, 0, 1, 1], [], []>} : vector<8x128xbf16>, vector<128x128xbf16>, vector<8x128xf32> -> vector<8x128xf32>
    %c0_15 = arith.constant 0 : index
    %c0_16 = arith.constant 0 : index
    %19 = vector.load %arg7[%c0_15, %c0_16] : memref<1x128xf32, #tpu.memory_space<vmem>>, vector<1x128xf32>
    %20 = vector.broadcast %19 : vector<1x128xf32> to vector<8x128xf32>
    %21 = arith.addf %18, %20 : vector<8x128xf32>
    %cst_17 = arith.constant 0.000000e+00 : f32
    %22 = vector.broadcast %cst_17 : f32 to vector<8x128xf32>
    %23 = arith.maximumf %21, %22 : vector<8x128xf32>
    %c0_18 = arith.constant 0 : index
    %c0_19 = arith.constant 0 : index
    %24 = vector.load %arg8[%c0_18, %c0_19] : memref<8x128xf32, #tpu.memory_space<vmem>>, vector<8x128xf32>
    tpu.vector_store %arg8[%c0_18, %c0_19], %23 {strides = array<i32>} : memref<8x128xf32, #tpu.memory_space<vmem>>, vector<8x128xf32>,
    return
  }
  func.func @transform_0(%arg0: i32) -> (i32, i32) {
    %c0_i32 = arith.constant 0 : i32
    %c0_i32_0 = arith.constant 0 : i32
    return %arg0, %c0_i32 : i32, i32
  }
  func.func @transform_1(%arg0: i32) -> (i32, i32) {
    %c0_i32 = arith.constant 0 : i32
    %c0_i32_0 = arith.constant 0 : i32
    %c0_i32_1 = arith.constant 0 : i32
    return %c0_i32, %c0_i32_0 : i32, i32
  }
  func.func @transform_2(%arg0: i32) -> (i32, i32) {
    %c0_i32 = arith.constant 0 : i32
    %c0_i32_0 = arith.constant 0 : i32
    %c0_i32_1 = arith.constant 0 : i32
    return %c0_i32, %c0_i32_0 : i32, i32
  }
  func.func @transform_3(%arg0: i32) -> (i32, i32) {
    %c0_i32 = arith.constant 0 : i32
    %c0_i32_0 = arith.constant 0 : i32
    %c0_i32_1 = arith.constant 0 : i32
    return %c0_i32, %c0_i32_0 : i32, i32
  }
  func.func @transform_4(%arg0: i32) -> (i32, i32) {
    %c0_i32 = arith.constant 0 : i32
    %c0_i32_0 = arith.constant 0 : i32
    %c0_i32_1 = arith.constant 0 : i32
    return %c0_i32, %c0_i32_0 : i32, i32
  }
  func.func @transform_5(%arg0: i32) -> (i32, i32) {
    %c0_i32 = arith.constant 0 : i32
    %c0_i32_0 = arith.constant 0 : i32
    %c0_i32_1 = arith.constant 0 : i32
    return %c0_i32, %c0_i32_0 : i32, i32
  }
  func.func @transform_6(%arg0: i32) -> (i32, i32) {
    %c0_i32 = arith.constant 0 : i32
    %c0_i32_0 = arith.constant 0 : i32
    %c0_i32_1 = arith.constant 0 : i32
    return %c0_i32, %c0_i32_0 : i32, i32
  }
  func.func @transform_7(%arg0: i32) -> (i32, i32) {
    %c0_i32 = arith.constant 0 : i32
    %c0_i32_0 = arith.constant 0 : i32
    return %arg0, %c0_i32 : i32, i32
  }
}

</mosaic_0001>

<llo_original>
// kernel: forward.1
$region0: #{forward.1}
  #allocation0 [shape = 'u32[]', space=smem, size = 0x4, offset = 0x4, fixed_abs, tag = 'smem constant byte address 0x4 - core index']
  #allocation1 [shape = 'u32[144,128]{1,0:T(1,128)}', space=vmem, size = 0x12000, scoped, tag = 'internal scratch']
  %s0 = inlined_call_operand.vmem [shape: bf16[8,128], index: 0, kind: input, shape index: {}]
  %s1 = inlined_call_operand.vmem [shape: bf16[128,128], index: 1, kind: input, shape index: {}]
  %s2 = inlined_call_operand.vmem [shape: f32[1,128], index: 2, kind: input, shape index: {}]
  %s3 = inlined_call_operand.vmem [shape: bf16[128,128], index: 3, kind: input, shape index: {}]
  %s4 = inlined_call_operand.vmem [shape: f32[1,128], index: 4, kind: input, shape index: {}]
  %s5 = inlined_call_operand.vmem [shape: bf16[128,128], index: 5, kind: input, shape index: {}]
  %s6 = inlined_call_operand.vmem [shape: f32[1,128], index: 6, kind: input, shape index: {}]
  %s7 = inlined_call_operand.hbm [shape: f32[8,128], index: 7, kind: output, shape index: {}]
  %s8 = sld [smem:[#allocation0]]
  $region38: #{forward.1} parent=0
    _
  %s10 = ssub.s32 1, %s8
  %s11 = scalar_select 0, %s10, %s8
  $region1: #{forward.1} parent=0
    #allocation2 [shape = 'u8[4096]{0}', space=vmem, size = 0x1000, scoped, tag = 'output window, operand 0, single buffered']
    #allocation3 [shape = 's32[1]{0}', space=sflag, size = 0x4, scoped, tag = 'scoped memory for forward.1']
    %12 = vsyncpa [#allocation3], 0
    // Predicated region
    $region2: #{forward.1} parent=1 // pred_check
      _
    $region3: #{forward.1} parent=1 // pred_check_branch
      %14 = sbr.rel (0) target = $region5
    $region4: #{forward.1} parent=1 // pred_region
      _
    $region5: #{forward.1} parent=1 // pred_fallthru
      _
    // Predicated region
    $region6: #{forward.1} parent=1 // pred_check
      _
    $region7: #{forward.1} parent=1 // pred_check_branch
      %16 = sbr.rel (0) target = $region9
    $region8: #{forward.1} parent=1 // pred_region
      _
    $region9: #{forward.1} parent=1 // pred_fallthru
      _
    // Predicated region
    $region10: #{forward.1} parent=1 // pred_check
      _
    $region11: #{forward.1} parent=1 // pred_check_branch
      %18 = sbr.rel (0) target = $region13
    $region12: #{forward.1} parent=1 // pred_region
      _
    $region13: #{forward.1} parent=1 // pred_fallthru
      _
    // Predicated region
    $region14: #{forward.1} parent=1 // pred_check
      _
    $region15: #{forward.1} parent=1 // pred_check_branch
      %20 = sbr.rel (0) target = $region17
    $region16: #{forward.1} parent=1 // pred_region
      _
    $region17: #{forward.1} parent=1 // pred_fallthru
      _
    // Predicated region
    $region18: #{forward.1} parent=1 // pred_check
      _
    $region19: #{forward.1} parent=1 // pred_check_branch
      %22 = sbr.rel (0) target = $region21
    $region20: #{forward.1} parent=1 // pred_region
      _
    $region21: #{forward.1} parent=1 // pred_fallthru
      _
    // Predicated region
    $region22: #{forward.1} parent=1 // pred_check
      _
    $region23: #{forward.1} parent=1 // pred_check_branch
      %24 = sbr.rel (0) target = $region25
    $region24: #{forward.1} parent=1 // pred_region
      _
    $region25: #{forward.1} parent=1 // pred_fallthru
      _
    // Predicated region
    $region26: #{forward.1} parent=1 // pred_check
      _
    $region27: #{forward.1} parent=1 // pred_check_branch
      %26 = sbr.rel (0) target = $region29
    $region28: #{forward.1} parent=1 // pred_region
      _
    $region29: #{forward.1} parent=1 // pred_fallthru
      _
    %v28 = vld [vmem:[%s0] sm:$0xf]
    %v29 = vld [vmem:[%s1] sm:$0xf]
    %v30 = vld [vmem:[%s1 + $0x4] sm:$0xf]
    %v31 = vld [vmem:[%s1 + $0x8] sm:$0xf]
    %v32 = vld [vmem:[%s1 + $0xc] sm:$0xf]
    %v33 = vld [vmem:[%s1 + $0x10] sm:$0xf]
    %v34 = vld [vmem:[%s1 + $0x14] sm:$0xf]
    %v35 = vld [vmem:[%s1 + $0x18] sm:$0xf]
    %v36 = vld [vmem:[%s1 + $0x1c] sm:$0xf]
    %v37 = vld [vmem:[%s1 + $0x20] sm:$0xf]
    %v38 = vld [vmem:[%s1 + $0x24] sm:$0xf]
    %v39 = vld [vmem:[%s1 + $0x28] sm:$0xf]
    %v40 = vld [vmem:[%s1 + $0x2c] sm:$0xf]
    %v41 = vld [vmem:[%s1 + $0x30] sm:$0xf]
    %v42 = vld [vmem:[%s1 + $0x34] sm:$0xf]
    %v43 = vld [vmem:[%s1 + $0x38] sm:$0xf]
    %v44 = vld [vmem:[%s1 + $0x3c] sm:$0xf]
    %v45 = vld [vmem:[%s2] sm:$0x1]
    %v47 = vlaneseq
    %v48 = vshrl.u32 %v47, 7
    %v49 = vsub.s32 0, %v48
    %v50 = vrot.slane %v45, %v49
    %v68 = vunpack.c.l.b16 %v29
    %v69 = vunpack.c.l.b16 %v30
    %v70 = vunpack.c.l.b16 %v31
    %v71 = vunpack.c.l.b16 %v32
    %v72 = vunpack.c.l.b16 %v33
    %v73 = vunpack.c.l.b16 %v34
    %v74 = vunpack.c.l.b16 %v35
    %v75 = vunpack.c.l.b16 %v36
    %v76 = vunpack.c.l.b16 %v37
    %v77 = vunpack.c.l.b16 %v38
    %v78 = vunpack.c.l.b16 %v39
    %v79 = vunpack.c.l.b16 %v40
    %v80 = vunpack.c.l.b16 %v41
    %v81 = vunpack.c.l.b16 %v42
    %v82 = vunpack.c.l.b16 %v43
    %v83 = vunpack.c.l.b16 %v44
    %v84 = vpack.c.b16 %v69, %v68
    %v85 = vpack.c.b16 %v71, %v70
    %v86 = vpack.c.b16 %v73, %v72
    %v87 = vpack.c.b16 %v75, %v74
    %v88 = vpack.c.b16 %v77, %v76
    %v89 = vpack.c.b16 %v79, %v78
    %v90 = vpack.c.b16 %v81, %v80
    %v91 = vpack.c.b16 %v83, %v82
    %100 = vmatprep.subr.bf16.mxu0 0
    %101 = vmatpush1.bf16.msra.mxu0 %v84
    %102 = vmatprep.subr.bf16.mxu0 0
    %103 = vmatpush1.bf16.msra.mxu0 %v85
    %104 = vmatprep.subr.bf16.mxu0 0
    %105 = vmatpush1.bf16.msra.mxu0 %v86
    %106 = vmatprep.subr.bf16.mxu0 0
    %107 = vmatpush1.bf16.msra.mxu0 %v87
    %108 = vmatprep.subr.bf16.mxu0 0
    %109 = vmatpush1.bf16.msra.mxu0 %v88
    %110 = vmatprep.subr.bf16.mxu0 0
    %111 = vmatpush1.bf16.msra.mxu0 %v89
    %112 = vmatprep.subr.bf16.mxu0 0
    %113 = vmatpush1.bf16.msra.mxu0 %v90
    %114 = vmatprep.subr.bf16.mxu0 0
    %115 = vmatpush1.bf16.msra.mxu0 %v91
    %116 = vmatprep.subr.bf16.mxu0 0
    %117 = vmatpush1.bf16.msra.mxu0 0
    %118 = vmatprep.subr.bf16.mxu0 0
    %119 = vmatpush1.bf16.msra.mxu0 0
    %120 = vmatprep.subr.bf16.mxu0 0
    %121 = vmatpush1.bf16.msra.mxu0 0
    %122 = vmatprep.subr.bf16.mxu0 0
    %123 = vmatpush1.bf16.msra.mxu0 0
    %124 = vmatprep.subr.bf16.mxu0 0
    %125 = vmatpush1.bf16.msra.mxu0 0
    %126 = vmatprep.subr.bf16.mxu0 0
    %127 = vmatpush1.bf16.msra.mxu0 0
    %128 = vmatprep.subr.bf16.mxu0 0
    %129 = vmatpush1.bf16.msra.mxu0 0
    %130 = vmatprep.subr.bf16.mxu0 0
    %131 = vmatpush1.bf16.msra.mxu0 0
    %132 = vmatprep.mubr.bf16.mxu0 0
    %133 = vmatmul.mubr.bf16.gmra.mrb[0].mxu0 %v28
    %v134 = vpop.f32.mrb[0].mxu0
    %v135 = vadd.f32 %v50, %v134
    %v136 = vpop.f32.mrb[0].mxu0
    %v137 = vpop.f32.mrb[0].mxu0
    %v138 = vpop.f32.mrb[0].mxu0
    %139 = vdwg.mxu0
    %v140 = vmax.f32 %v135, 0.0
    %v141 = vpack.c.bf16 %v140, %v140
    %v142 = vld [vmem:[%s3] sm:$0xf]
    %v143 = vld [vmem:[%s3 + $0x4] sm:$0xf]
    %v144 = vld [vmem:[%s3 + $0x8] sm:$0xf]
    %v145 = vld [vmem:[%s3 + $0xc] sm:$0xf]
    %v146 = vld [vmem:[%s3 + $0x10] sm:$0xf]
    %v147 = vld [vmem:[%s3 + $0x14] sm:$0xf]
    %v148 = vld [vmem:[%s3 + $0x18] sm:$0xf]
    %v149 = vld [vmem:[%s3 + $0x1c] sm:$0xf]
    %v150 = vld [vmem:[%s3 + $0x20] sm:$0xf]
    %v151 = vld [vmem:[%s3 + $0x24] sm:$0xf]
    %v152 = vld [vmem:[%s3 + $0x28] sm:$0xf]
    %v153 = vld [vmem:[%s3 + $0x2c] sm:$0xf]
    %v154 = vld [vmem:[%s3 + $0x30] sm:$0xf]
    %v155 = vld [vmem:[%s3 + $0x34] sm:$0xf]
    %v156 = vld [vmem:[%s3 + $0x38] sm:$0xf]
    %v157 = vld [vmem:[%s3 + $0x3c] sm:$0xf]
    %v158 = vld [vmem:[%s4] sm:$0x1]
    %v160 = vlaneseq
    %v161 = vshrl.u32 %v160, 7
    %v162 = vsub.s32 0, %v161
    %v163 = vrot.slane %v158, %v162
    %v181 = vunpack.c.l.b16 %v142
    %v182 = vunpack.c.l.b16 %v143
    %v183 = vunpack.c.l.b16 %v144
    %v184 = vunpack.c.l.b16 %v145
    %v185 = vunpack.c.l.b16 %v146
    %v186 = vunpack.c.l.b16 %v147
    %v187 = vunpack.c.l.b16 %v148
    %v188 = vunpack.c.l.b16 %v149
    %v189 = vunpack.c.l.b16 %v150
    %v190 = vunpack.c.l.b16 %v151
    %v191 = vunpack.c.l.b16 %v152
    %v192 = vunpack.c.l.b16 %v153
    %v193 = vunpack.c.l.b16 %v154
    %v194 = vunpack.c.l.b16 %v155
    %v195 = vunpack.c.l.b16 %v156
    %v196 = vunpack.c.l.b16 %v157
    %v197 = vpack.c.b16 %v182, %v181
    %v198 = vpack.c.b16 %v184, %v183
    %v199 = vpack.c.b16 %v186, %v185
    %v200 = vpack.c.b16 %v188, %v187
    %v201 = vpack.c.b16 %v190, %v189
    %v202 = vpack.c.b16 %v192, %v191
    %v203 = vpack.c.b16 %v194, %v193
    %v204 = vpack.c.b16 %v196, %v195
    %213 = vmatprep.subr.bf16.mxu0 0
    %214 = vmatpush1.bf16.msra.mxu0 %v197
    %215 = vmatprep.subr.bf16.mxu0 0
    %216 = vmatpush1.bf16.msra.mxu0 %v198
    %217 = vmatprep.subr.bf16.mxu0 0
    %218 = vmatpush1.bf16.msra.mxu0 %v199
    %219 = vmatprep.subr.bf16.mxu0 0
    %220 = vmatpush1.bf16.msra.mxu0 %v200
    %221 = vmatprep.subr.bf16.mxu0 0
    %222 = vmatpush1.bf16.msra.mxu0 %v201
    %223 = vmatprep.subr.bf16.mxu0 0
    %224 = vmatpush1.bf16.msra.mxu0 %v202
    %225 = vmatprep.subr.bf16.mxu0 0
    %226 = vmatpush1.bf16.msra.mxu0 %v203
    %227 = vmatprep.subr.bf16.mxu0 0
    %228 = vmatpush1.bf16.msra.mxu0 %v204
    %229 = vmatprep.subr.bf16.mxu0 0
    %230 = vmatpush1.bf16.msra.mxu0 0
    %231 = vmatprep.subr.bf16.mxu0 0
    %232 = vmatpush1.bf16.msra.mxu0 0
    %233 = vmatprep.subr.bf16.mxu0 0
    %234 = vmatpush1.bf16.msra.mxu0 0
    %235 = vmatprep.subr.bf16.mxu0 0
    %236 = vmatpush1.bf16.msra.mxu0 0
    %237 = vmatprep.subr.bf16.mxu0 0
    %238 = vmatpush1.bf16.msra.mxu0 0
    %239 = vmatprep.subr.bf16.mxu0 0
    %240 = vmatpush1.bf16.msra.mxu0 0
    %241 = vmatprep.subr.bf16.mxu0 0
    %242 = vmatpush1.bf16.msra.mxu0 0
    %243 = vmatprep.subr.bf16.mxu0 0
    %244 = vmatpush1.bf16.msra.mxu0 0
    %245 = vmatprep.mubr.bf16.mxu0 0
    %246 = vmatmul.mubr.bf16.gmra.mrb[0].mxu0 %v141
    %v247 = vpop.f32.mrb[0].mxu0
    %v248 = vadd.f32 %v163, %v247
    %v249 = vpop.f32.mrb[0].mxu0
    %v250 = vpop.f32.mrb[0].mxu0
    %v251 = vpop.f32.mrb[0].mxu0
    %252 = vdwg.mxu0
    %v253 = vmax.f32 %v248, 0.0
    %v254 = vpack.c.bf16 %v253, %v253
    %v255 = vld [vmem:[%s5] sm:$0xf]
    %v256 = vld [vmem:[%s5 + $0x4] sm:$0xf]
    %v257 = vld [vmem:[%s5 + $0x8] sm:$0xf]
    %v258 = vld [vmem:[%s5 + $0xc] sm:$0xf]
    %v259 = vld [vmem:[%s5 + $0x10] sm:$0xf]
    %v260 = vld [vmem:[%s5 + $0x14] sm:$0xf]
    %v261 = vld [vmem:[%s5 + $0x18] sm:$0xf]
    %v262 = vld [vmem:[%s5 + $0x1c] sm:$0xf]
    %v263 = vld [vmem:[%s5 + $0x20] sm:$0xf]
    %v264 = vld [vmem:[%s5 + $0x24] sm:$0xf]
    %v265 = vld [vmem:[%s5 + $0x28] sm:$0xf]
    %v266 = vld [vmem:[%s5 + $0x2c] sm:$0xf]
    %v267 = vld [vmem:[%s5 + $0x30] sm:$0xf]
    %v268 = vld [vmem:[%s5 + $0x34] sm:$0xf]
    %v269 = vld [vmem:[%s5 + $0x38] sm:$0xf]
    %v270 = vld [vmem:[%s5 + $0x3c] sm:$0xf]
    %v271 = vld [vmem:[%s6] sm:$0x1]
    %v273 = vlaneseq
    %v274 = vshrl.u32 %v273, 7
    %v275 = vsub.s32 0, %v274
    %v276 = vrot.slane %v271, %v275
    %v294 = vunpack.c.l.b16 %v255
    %v295 = vunpack.c.l.b16 %v256
    %v296 = vunpack.c.l.b16 %v257
    %v297 = vunpack.c.l.b16 %v258
    %v298 = vunpack.c.l.b16 %v259
    %v299 = vunpack.c.l.b16 %v260
    %v300 = vunpack.c.l.b16 %v261
    %v301 = vunpack.c.l.b16 %v262
    %v302 = vunpack.c.l.b16 %v263
    %v303 = vunpack.c.l.b16 %v264
    %v304 = vunpack.c.l.b16 %v265
    %v305 = vunpack.c.l.b16 %v266
    %v306 = vunpack.c.l.b16 %v267
    %v307 = vunpack.c.l.b16 %v268
    %v308 = vunpack.c.l.b16 %v269
    %v309 = vunpack.c.l.b16 %v270
    %v310 = vpack.c.b16 %v295, %v294
    %v311 = vpack.c.b16 %v297, %v296
    %v312 = vpack.c.b16 %v299, %v298
    %v313 = vpack.c.b16 %v301, %v300
    %v314 = vpack.c.b16 %v303, %v302
    %v315 = vpack.c.b16 %v305, %v304
    %v316 = vpack.c.b16 %v307, %v306
    %v317 = vpack.c.b16 %v309, %v308
    %326 = vmatprep.subr.bf16.mxu0 0
    %327 = vmatpush1.bf16.msra.mxu0 %v310
    %328 = vmatprep.subr.bf16.mxu0 0
    %329 = vmatpush1.bf16.msra.mxu0 %v311
    %330 = vmatprep.subr.bf16.mxu0 0
    %331 = vmatpush1.bf16.msra.mxu0 %v312
    %332 = vmatprep.subr.bf16.mxu0 0
    %333 = vmatpush1.bf16.msra.mxu0 %v313
    %334 = vmatprep.subr.bf16.mxu0 0
    %335 = vmatpush1.bf16.msra.mxu0 %v314
    %336 = vmatprep.subr.bf16.mxu0 0
    %337 = vmatpush1.bf16.msra.mxu0 %v315
    %338 = vmatprep.subr.bf16.mxu0 0
    %339 = vmatpush1.bf16.msra.mxu0 %v316
    %340 = vmatprep.subr.bf16.mxu0 0
    %341 = vmatpush1.bf16.msra.mxu0 %v317
    %342 = vmatprep.subr.bf16.mxu0 0
    %343 = vmatpush1.bf16.msra.mxu0 0
    %344 = vmatprep.subr.bf16.mxu0 0
    %345 = vmatpush1.bf16.msra.mxu0 0
    %346 = vmatprep.subr.bf16.mxu0 0
    %347 = vmatpush1.bf16.msra.mxu0 0
    %348 = vmatprep.subr.bf16.mxu0 0
    %349 = vmatpush1.bf16.msra.mxu0 0
    %350 = vmatprep.subr.bf16.mxu0 0
    %351 = vmatpush1.bf16.msra.mxu0 0
    %352 = vmatprep.subr.bf16.mxu0 0
    %353 = vmatpush1.bf16.msra.mxu0 0
    %354 = vmatprep.subr.bf16.mxu0 0
    %355 = vmatpush1.bf16.msra.mxu0 0
    %356 = vmatprep.subr.bf16.mxu0 0
    %357 = vmatpush1.bf16.msra.mxu0 0
    %358 = vmatprep.mubr.bf16.mxu0 0
    %359 = vmatmul.mubr.bf16.gmra.mrb[0].mxu0 %v254
    %v360 = vpop.f32.mrb[0].mxu0
    %v361 = vadd.f32 %v276, %v360
    %v362 = vpop.f32.mrb[0].mxu0
    %v363 = vpop.f32.mrb[0].mxu0
    %v364 = vpop.f32.mrb[0].mxu0
    %365 = vdwg.mxu0
    %v366 = vmax.f32 %v361, 0.0
    %367 = vst [vmem:[#allocation2] sm:$0xff] %v366
    // Predicated region
    $region30: #{forward.1} parent=1 // pred_check
      _
    $region31: #{forward.1} parent=1 // pred_check_branch
      %369 = sbr.rel (0) target = $region33
    $region32: #{forward.1} parent=1 // pred_region
      %s371 = ssub.s32 128, 128
      %372 = vsyncadd [#allocation3], %s371
      %s374 = sshll.u32 [#allocation2], 4
      %s375 = int_to_ptr.vmem [resolvable:$true] %s374
      %377 = dma.vmem_to_hbm [thread:$0]  %s375, 128, %s7, [#allocation3]
    $region33: #{forward.1} parent=1 // pred_fallthru
      _
    // Predicated region
    $region34: #{forward.1} parent=1 // pred_check
      _
    $region35: #{forward.1} parent=1 // pred_check_branch
      %379 = sbr.rel (0) target = $region37
    $region36: #{forward.1} parent=1 // pred_region
      %380 = dma.done [#allocation3], 128
    $region37: #{forward.1} parent=1 // pred_fallthru
      _
    %381 = vsyncpa [#allocation3], 1

</llo_original>
